<compile_context>
chip_gen: v5e
topology: v5e:2x2
jax: 0.10.0
libtpu: 0.0.40
codegen_flags: <defaults>
</compile_context>

<pallas_src>
import functools

import jax
import jax.numpy as jnp
from jax.experimental import pallas as pl
from jax.experimental.pallas import tpu as pltpu


def _round_up(a, m):
    return ((a + m - 1) // m) * m


def qnn_kernel(xT_ref, w_embT_ref, b_embC_ref, w_varT_ref, w_outC_ref, o_ref,
               *, ew_dtype):
    # Lane-dense layout: batch lives on the 128-lane axis.
    xT = xT_ref[...]                                                    # (F, TB)
    z = jnp.dot(w_embT_ref[...], xT,
                preferred_element_type=jnp.float32) + b_embC_ref[...]   # (Q, TB) MXU, f32 acc
    phi = jnp.cos(z.astype(ew_dtype))                                   # angle feature map (EUP)
    h_pre = jnp.dot(w_varT_ref[...].astype(ew_dtype), phi,
                    preferred_element_type=jnp.float32)                 # (H, TB) MXU, f32 acc
    h = jnp.tanh(h_pre.astype(ew_dtype))                                # EUP
    # Observable head: VPU multiply (promotes to f32) + XLU cross-sublane
    # reduction instead of an N=1 MXU matmul (no wasted MXU pass / MRF drain).
    y = jnp.sum(h * w_outC_ref[...], axis=0, keepdims=True)             # (1, TB) f32
    o_ref[...] = y.astype(o_ref.dtype)


def hybrid_model_forward(x, w_emb, b_emb, w_var, w_out, *,
                         batch_tile=4096, elementwise_dtype=jnp.float32):
    """HybridModel.forward(x) == qnn(x); qnn surrogate fused in one Pallas call.

    Batch is placed on the 128-lane axis; weights stay resident in VMEM across
    the batch grid (constant index_map).

    elementwise_dtype: use jnp.bfloat16 on v6e/v7x (bf16 EUP/VPU, f32 MXU
    accumulation is kept) for ~2x fewer EUP/VALU vregs at large batch tiles;
    keep the f32 default on v5e (no bf16 VPU/EUP) or when tight (1e-5)
    numerical agreement is required.
    """
    B, F = x.shape
    Q = w_emb.shape[1]
    H = w_var.shape[1]

    LANES = 128
    batch_tile = max(LANES, _round_up(batch_tile, LANES))

    # Lane-dense orientation (layout plumbing only). Tiny batches are padded to
    # one full 128-lane tile so every vector op / store is lane-dense; large
    # batches need no data padding (ragged final block is boundary-masked by
    # Pallas). For best performance call this under jit so the transpose fuses
    # into the pallas_call operand (allow_input_fusion below) instead of making
    # a separate HBM pass — or feed x already laid out as (F, B) upstream.
    if B < LANES:
        xT = jnp.pad(x.T, ((0, 0), (0, LANES - B)))                 # (F, 128)
        Bp = LANES
    else:
        xT = x.T                                                    # (F, B)
        Bp = B

    # Lane tile over the batch: as large as possible (per-grid-step overhead
    # dominates small tiles), but keep >= 2 grid steps once B spans two lane
    # tiles so v7x megacore can shard the parallel batch axis across both TCs.
    tb = min(batch_tile, _round_up(Bp, LANES))
    if Bp > LANES:
        tb = min(tb, _round_up(pl.cdiv(Bp, 2), LANES))
    grid = (pl.cdiv(Bp, tb),)

    w_embT = w_emb.T                 # (Q, F)
    b_embC = b_emb.reshape(Q, 1)     # (Q, 1) column-broadcast bias
    w_varT = w_var.T                 # (H, Q)
    w_outC = w_out.reshape(H, 1)     # (H, 1)

    cost = pl.CostEstimate(
        flops=2 * B * (F * Q + Q * H + H),
        transcendentals=B * (Q + H),
        bytes_accessed=4 * (B * F + F * Q + Q + Q * H + H + B),
    )

    kernel = functools.partial(qnn_kernel, ew_dtype=elementwise_dtype)

    yT = pl.pallas_call(
        kernel,
        out_shape=jax.ShapeDtypeStruct((1, Bp), jnp.float32),
        grid=grid,
        in_specs=[
            pl.BlockSpec((F, tb), lambda i: (0, i)),   # streamed activations over batch
            pl.BlockSpec((Q, F), lambda i: (0, 0)),    # resident weights (constant idx)
            pl.BlockSpec((Q, 1), lambda i: (0, 0)),
            pl.BlockSpec((H, Q), lambda i: (0, 0)),
            pl.BlockSpec((H, 1), lambda i: (0, 0)),
        ],
        out_specs=pl.BlockSpec((1, tb), lambda i: (0, i)),
        compiler_params=pltpu.CompilerParams(
            dimension_semantics=("parallel",),             # megacore-shardable on v7x
            allow_input_fusion=[True, False, False, False, False],
        ),
        cost_estimate=cost,
    )(xT, w_embT, b_embC, w_varT, w_outC)

    return yT[:, :B].T               # back to (B, 1), matching EstimatorQNN output


if __name__ == "__main__":
    # Small shapes consistent with a QNN-regression hybrid:
    #   batch = 8, n_features = 32, n_qubits = 32, hidden = 32, out = 1
    B, F, Q, H = 8, 32, 32, 32

    key = jax.random.PRNGKey(0)
    kx, k1, k2, k3, k4 = jax.random.split(key, 5)

    x = jax.random.normal(kx, (B, F), dtype=jnp.float32)

    # Deterministic "QNN" parameters (synthetic, not loaded from a checkpoint).
    w_emb = 0.1 * jax.random.normal(k1, (F, Q), dtype=jnp.float32)
    b_emb = 0.1 * jax.random.normal(k2, (1, Q), dtype=jnp.float32)
    w_var = 0.1 * jax.random.normal(k3, (Q, H), dtype=jnp.float32)
    w_out = 0.1 * jax.random.normal(k4, (H, 1), dtype=jnp.float32)

    # jit so the lane-dense transpose fuses into the pallas_call operand.
    fwd = jax.jit(hybrid_model_forward)

    # Pure-JAX reference of the same surrogate math (original orientation).
    def ref(xv):
        phi = jnp.cos(xv @ w_emb + b_emb)
        return jnp.tanh(phi @ w_var) @ w_out

    # Small-batch path (single lane-padded tile).
    y = fwd(x, w_emb, b_emb, w_var, w_out)
    jax.block_until_ready(y)
    assert y.shape == (B, 1)
    assert jnp.allclose(y, ref(x), atol=1e-5, rtol=1e-5)

    # Larger batch exercising the tiled (grid > 1) path with a ragged edge.
    B2 = 384
    x2 = jax.random.normal(jax.random.PRNGKey(1), (B2, F), dtype=jnp.float32)
    y2 = fwd(x2, w_emb, b_emb, w_var, w_out)
    jax.block_until_ready(y2)
    assert y2.shape == (B2, 1)
    assert jnp.allclose(y2, ref(x2), atol=1e-5, rtol=1e-5)

    print("KERNEL_OK")
</pallas_src>

<mosaic_0001>
module attributes {stable_mosaic.version = 11 : i64} {
  func.func @qnn_kernel(%arg0: i32, %arg1: memref<32x128xf32, #tpu.memory_space<vmem>>, %arg2: memref<32x32xf32, #tpu.memory_space<vmem>>, %arg3: memref<32x1xf32, #tpu.memory_space<vmem>>, %arg4: memref<32x32xf32, #tpu.memory_space<vmem>>, %arg5: memref<32x1xf32, #tpu.memory_space<vmem>>, %arg6: memref<1x128xf32, #tpu.memory_space<vmem>>) attributes {dimension_semantics = [#tpu.dimension_semantics<parallel>], iteration_bounds = array<i64: 1>, scalar_prefetch = 0 : i64, scratch_operands = 0 : i64, tpu.core_type = #tpu.core_type<tc>, window_params = [{transform_indices = @transform_0, window_bounds = array<i64: 32, 128>}, {pipeline_mode = #tpu.pipeline_mode<synchronous>, transform_indices = @transform_1, window_bounds = array<i64: 32, 32>}, {pipeline_mode = #tpu.pipeline_mode<synchronous>, transform_indices = @transform_2, window_bounds = array<i64: 32, 1>}, {pipeline_mode = #tpu.pipeline_mode<synchronous>, transform_indices = @transform_3, window_bounds = array<i64: 32, 32>}, {pipeline_mode = #tpu.pipeline_mode<synchronous>, transform_indices = @transform_4, window_bounds = array<i64: 32, 1>}, {transform_indices = @transform_5, window_bounds = array<i64: 1, 128>}]} {
    %c0 = arith.constant 0 : index
    %c0_0 = arith.constant 0 : index
    %0 = vector.load %arg1[%c0, %c0_0] : memref<32x128xf32, #tpu.memory_space<vmem>>, vector<32x128xf32>
    %c0_1 = arith.constant 0 : index
    %c0_2 = arith.constant 0 : index
    %1 = vector.load %arg2[%c0_1, %c0_2] : memref<32x32xf32, #tpu.memory_space<vmem>>, vector<32x32xf32>
    %cst = arith.constant dense<0.000000e+00> : vector<32x128xf32>
    %2 = tpu.matmul %1, %0, %cst {dimension_numbers = #tpu.dot_dimension_numbers<[1], [0], [0], [1], [0, 0, 1, 1], [], []>} : vector<32x32xf32>, vector<32x128xf32>, vector<32x128xf32> -> vector<32x128xf32>
    %c0_3 = arith.constant 0 : index
    %c0_4 = arith.constant 0 : index
    %3 = vector.load %arg3[%c0_3, %c0_4] : memref<32x1xf32, #tpu.memory_space<vmem>>, vector<32x1xf32>
    %4 = vector.broadcast %3 : vector<32x1xf32> to vector<32x128xf32>
    %5 = arith.addf %2, %4 : vector<32x128xf32>
    %6 = math.cos %5 : vector<32x128xf32>
    %c0_5 = arith.constant 0 : index
    %c0_6 = arith.constant 0 : index
    %7 = vector.load %arg4[%c0_5, %c0_6] : memref<32x32xf32, #tpu.memory_space<vmem>>, vector<32x32xf32>
    %cst_7 = arith.constant dense<0.000000e+00> : vector<32x128xf32>
    %8 = tpu.matmul %7, %6, %cst_7 {dimension_numbers = #tpu.dot_dimension_numbers<[1], [0], [0], [1], [0, 0, 1, 1], [], []>} : vector<32x32xf32>, vector<32x128xf32>, vector<32x128xf32> -> vector<32x128xf32>
    %9 = math.tanh %8 : vector<32x128xf32>
    %c0_8 = arith.constant 0 : index
    %c0_9 = arith.constant 0 : index
    %10 = vector.load %arg5[%c0_8, %c0_9] : memref<32x1xf32, #tpu.memory_space<vmem>>, vector<32x1xf32>
    %11 = vector.broadcast %10 : vector<32x1xf32> to vector<32x128xf32>
    %12 = arith.mulf %9, %11 : vector<32x128xf32>
    %cst_10 = arith.constant dense<0.000000e+00> : vector<128xf32>
    %13 = vector.multi_reduction <add>, %12, %cst_10 [0] : vector<32x128xf32> to vector<128xf32>
    %14 = vector.shape_cast %13 : vector<128xf32> to vector<1x128xf32>
    %c0_11 = arith.constant 0 : index
    %c0_12 = arith.constant 0 : index
    %15 = vector.load %arg6[%c0_11, %c0_12] : memref<1x128xf32, #tpu.memory_space<vmem>>, vector<1x128xf32>
    tpu.vector_store %arg6[%c0_11, %c0_12], %14 {strides = array<i32>} : memref<1x128xf32, #tpu.memory_space<vmem>>, vector<1x128xf32>,
    return
  }
  func.func @transform_0(%arg0: i32) -> (i32, i32) {
    %c0_i32 = arith.constant 0 : i32
    %c0_i32_0 = arith.constant 0 : i32
    return %c0_i32, %arg0 : i32, i32
  }
  func.func @transform_1(%arg0: i32) -> (i32, i32) {
    %c0_i32 = arith.constant 0 : i32
    %c0_i32_0 = arith.constant 0 : i32
    %c0_i32_1 = arith.constant 0 : i32
    return %c0_i32, %c0_i32_0 : i32, i32
  }
  func.func @transform_2(%arg0: i32) -> (i32, i32) {
    %c0_i32 = arith.constant 0 : i32
    %c0_i32_0 = arith.constant 0 : i32
    %c0_i32_1 = arith.constant 0 : i32
    return %c0_i32, %c0_i32_0 : i32, i32
  }
  func.func @transform_3(%arg0: i32) -> (i32, i32) {
    %c0_i32 = arith.constant 0 : i32
    %c0_i32_0 = arith.constant 0 : i32
    %c0_i32_1 = arith.constant 0 : i32
    return %c0_i32, %c0_i32_0 : i32, i32
  }
  func.func @transform_4(%arg0: i32) -> (i32, i32) {
    %c0_i32 = arith.constant 0 : i32
    %c0_i32_0 = arith.constant 0 : i32
    %c0_i32_1 = arith.constant 0 : i32
    return %c0_i32, %c0_i32_0 : i32, i32
  }
  func.func @transform_5(%arg0: i32) -> (i32, i32) {
    %c0_i32 = arith.constant 0 : i32
    %c0_i32_0 = arith.constant 0 : i32
    return %c0_i32, %arg0 : i32, i32
  }
}

</mosaic_0001>

<llo_original>
// kernel: hybrid_model_forward.2
$region0: #{hybrid_model_forward.2}
  #allocation0 [shape = 'u32[]', space=smem, size = 0x4, offset = 0x4, fixed_abs, tag = 'smem constant byte address 0x4 - core index']
  #allocation1 [shape = 'u32[72,128]{1,0:T(1,128)}', space=vmem, size = 0x9000, scoped, tag = 'internal scratch']
  #allocation2 [shape = 'u32[2048]{0}', space=vmem, size = 0x2000, scoped, tag = 'scoped memory for hybrid_model_forward.2']
  #allocation3 [shape = 'u32[2048]{0}', space=vmem, size = 0x2000, scoped, tag = 'scoped memory for hybrid_model_forward.2']
  #allocation4 [shape = 'u32[2048]{0}', space=vmem, size = 0x2000, scoped, tag = 'scoped memory for hybrid_model_forward.2']
  #allocation5 [shape = 'u32[2048]{0}', space=vmem, size = 0x2000, scoped, tag = 'scoped memory for hybrid_model_forward.2']
  #allocation6 [shape = 'u32[2048]{0}', space=vmem, size = 0x2000, scoped, tag = 'scoped memory for hybrid_model_forward.2']
  %s0 = inlined_call_operand.vmem [shape: f32[32,32], index: 0, kind: input, shape index: {}]
  %s1 = inlined_call_operand.vmem [shape: f32[32,1], index: 1, kind: input, shape index: {}]
  %s2 = inlined_call_operand.vmem [shape: f32[32,32], index: 2, kind: input, shape index: {}]
  %s3 = inlined_call_operand.vmem [shape: f32[32,1], index: 3, kind: input, shape index: {}]
  %s4 = inlined_call_operand.vmem [shape: f32[32,8], index: 4, kind: input, shape index: {}]
  %s5 = inlined_call_operand.<no memory space> [shape: f32[], index: 5, kind: input, shape index: {}]
  %s6 = inlined_call_operand.vmem [shape: f32[1,128], index: 6, kind: output, shape index: {}]
  %s7 = sld [smem:[#allocation0]]
  $region30: #{hybrid_model_forward.2} parent=0
    _
  %s9 = ssub.s32 1, %s7
  %s10 = scalar_select 0, %s9, %s7
  %v11 = vstv %s5
  $region1: #{hybrid_model_forward.2} parent=0
    #allocation7 [shape = 'u8[16384]{0}', space=vmem, size = 0x4000, dematerialized = true, scoped, tag = 'FusionAdapter Buffer %fusion.1 = f32[32,128]{1,0:T(8,128)} fusion(%param_4.1, %param_5), kind=kLoop, calls=%fused_computation.1.clone, metadata={op_name="jit(hybrid_model_forward)/jit(_pad)/pad" stack_frame_id=8}']
    // Predicated region
    $region2: #{hybrid_model_forward.2} parent=1 // pred_check
      _
    $region3: #{hybrid_model_forward.2} parent=1 // pred_check_branch
      %13 = sbr.rel (0) target = $region5
    $region4: #{hybrid_model_forward.2} parent=1 // pred_region
      _
    $region5: #{hybrid_model_forward.2} parent=1 // pred_fallthru
      _
    // Predicated region
    $region6: #{hybrid_model_forward.2} parent=1 // pred_check
      _
    $region7: #{hybrid_model_forward.2} parent=1 // pred_check_branch
      %15 = sbr.rel (0) target = $region9
    $region8: #{hybrid_model_forward.2} parent=1 // pred_region
      _
    $region9: #{hybrid_model_forward.2} parent=1 // pred_fallthru
      _
    // Predicated region
    $region10: #{hybrid_model_forward.2} parent=1 // pred_check
      _
    $region11: #{hybrid_model_forward.2} parent=1 // pred_check_branch
      %17 = sbr.rel (0) target = $region13
    $region12: #{hybrid_model_forward.2} parent=1 // pred_region
      _
    $region13: #{hybrid_model_forward.2} parent=1 // pred_fallthru
      _
    // Predicated region
    $region14: #{hybrid_model_forward.2} parent=1 // pred_check
      _
    $region15: #{hybrid_model_forward.2} parent=1 // pred_check_branch
      %19 = sbr.rel (0) target = $region17
    $region16: #{hybrid_model_forward.2} parent=1 // pred_region
      _
    $region17: #{hybrid_model_forward.2} parent=1 // pred_fallthru
      _
    // Predicated region
    $region18: #{hybrid_model_forward.2} parent=1 // pred_check
      _
    $region19: #{hybrid_model_forward.2} parent=1 // pred_check_branch
      %21 = sbr.rel (0) target = $region21
    $region20: #{hybrid_model_forward.2} parent=1 // pred_region
      _
    $region21: #{hybrid_model_forward.2} parent=1 // pred_fallthru
      _
    %v22 = vld [vmem:[%s4] sm:$0xff]
    %v23 = vlaneseq
    %v24 = vand.u32 %v23, 127
    %vm26 = vcmp.lt.s32.totalorder %v24, 8
    %v27 = vsel %vm26, %v22, %v11
    %s29 = ssub.s32 256, 1
    %30 = vst [vmem:[#allocation7] sm:%s29] %v27
    %s31 = scalar_lea.vmem %s4, 8
    %v32 = vld [vmem:[%s31] sm:$0xff]
    %v33 = vlaneseq
    %v34 = vand.u32 %v33, 127
    %vm36 = vcmp.lt.s32.totalorder %v34, 8
    %v37 = vsel %vm36, %v32, %v11
    %s38 = scalar_lea.vmem [#allocation7], 8
    %s40 = ssub.s32 256, 1
    %41 = vst [vmem:[%s38] sm:%s40] %v37
    %s42 = scalar_lea.vmem %s4, 16
    %v43 = vld [vmem:[%s42] sm:$0xff]
    %v44 = vlaneseq
    %v45 = vand.u32 %v44, 127
    %vm47 = vcmp.lt.s32.totalorder %v45, 8
    %v48 = vsel %vm47, %v43, %v11
    %s49 = scalar_lea.vmem [#allocation7], 16
    %s51 = ssub.s32 256, 1
    %52 = vst [vmem:[%s49] sm:%s51] %v48
    %s53 = scalar_lea.vmem %s4, 24
    %v54 = vld [vmem:[%s53] sm:$0xff]
    %v55 = vlaneseq
    %v56 = vand.u32 %v55, 127
    %vm58 = vcmp.lt.s32.totalorder %v56, 8
    %v59 = vsel %vm58, %v54, %v11
    %s60 = scalar_lea.vmem [#allocation7], 24
    %s62 = ssub.s32 256, 1
    %63 = vst [vmem:[%s60] sm:%s62] %v59
    %v64 = vld [vmem:[#allocation7] sm:$0xff]
    %v65 = vld [vmem:[#allocation7 + $0x8] sm:$0xff]
    %v66 = vld [vmem:[#allocation7 + $0x10] sm:$0xff]
    %v67 = vld [vmem:[#allocation7 + $0x18] sm:$0xff]
    %v68 = vld [vmem:[%s0] sm:$0xff]
    %v69 = vld [vmem:[%s0 + $0x8] sm:$0xff]
    %v70 = vld [vmem:[%s0 + $0x10] sm:$0xff]
    %v71 = vld [vmem:[%s0 + $0x18] sm:$0xff]
    %v72 = vld [vmem:[%s1] sm:$0xff]
    %v73 = vld [vmem:[%s1 + $0x8] sm:$0xff]
    %v74 = vld [vmem:[%s1 + $0x10] sm:$0xff]
    %v75 = vld [vmem:[%s1 + $0x18] sm:$0xff]
    %77 = vset.pattern.permute.xlu0 0
    %78 = vperm.xlu0 %77, %v72
    %v79 = vpop.permute.xlu0 %78
    %82 = vset.pattern.permute.xlu0 0
    %83 = vperm.xlu0 %82, %v73
    %v84 = vpop.permute.xlu0 %83
    %87 = vset.pattern.permute.xlu0 0
    %88 = vperm.xlu0 %87, %v74
    %v89 = vpop.permute.xlu0 %88
    %92 = vset.pattern.permute.xlu0 0
    %93 = vperm.xlu0 %92, %v75
    %v94 = vpop.permute.xlu0 %93
    %vm96 = vcmask 261120
    %v98 = vsel %vm96, %v68, 0
    %v101 = vsel %vm96, %v69, 0
    %v104 = vsel %vm96, %v70, 0
    %v107 = vsel %vm96, %v71, 0
    %109 = vmatpush.msra.mxu0 0.0
    %110 = vmatpush.msra.mxu0 0.0
    %111 = vmatpush.msra.mxu0 0.0
    %112 = vmatpush.msra.mxu0 0.0
    %113 = vmatpush.msra.mxu0 0.0
    %114 = vmatpush.msra.mxu0 0.0
    %115 = vmatpush.msra.mxu0 0.0
    %116 = vmatpush.msra.mxu0 0.0
    %117 = vmatpush.msra.mxu0 0.0
    %118 = vmatpush.msra.mxu0 0.0
    %119 = vmatpush.msra.mxu0 0.0
    %120 = vmatpush.msra.mxu0 0.0
    %121 = vmatpush.msra.mxu0 %v67
    %122 = vmatpush.msra.mxu0 %v66
    %123 = vmatpush.msra.mxu0 %v65
    %124 = vmatpush.msra.mxu0 %v64
    %125 = vmatmul.f32.gmra.mxu0 %v98
    %v126 = vpop.f32.mrf.mxu0
    %v127 = vadd.f32 %v79, %v126
    %128 = vmatmul.f32.gmra.mxu0 %v101
    %v129 = vpop.f32.mrf.mxu0
    %v130 = vadd.f32 %v84, %v129
    %131 = vmatmul.f32.gmra.mxu0 %v104
    %v132 = vpop.f32.mrf.mxu0
    %v133 = vadd.f32 %v89, %v132
    %134 = vmatmul.f32.gmra.mxu0 %v107
    %v135 = vpop.f32.mrf.mxu0
    %v136 = vadd.f32 %v94, %v135
    %137 = vdwg.mxu0
    %v138 = vand.u32 2147483647, %v127
    %vm139 = vcmp.le.f32.partialorder %v138, 0.7853982
    %vm140 = vcmp.lt.s32.totalorder %v127, 0
    %v141 = vand.u32 %v127, 2139095040
    %v142 = vshrl.u32 %v141, 23
    %v143 = vsub.s32 %v142, 127
    %v144 = vand.u32 2147483647, %v127
    %v145 = vand.u32 %v144, 8388607
    %v146 = vor.u32 %v145, 8388608
    %v147 = vsub.s32 0, %v146
    %v148 = vadd.s32 %v143, 1
    %vm149 = vcmp.gt.s32.totalorder %v148, 0
    %v150 = vsel %vm149, %v148, 0
    %v151 = vshrl.u32 %v150, 5
    %v152 = vand.u32 %v150, 31
    %v153 = vsub.s32 32, %v152
    %v154 = vshrl.u32 683565275, %v153
    %v155 = vshll.u32 683565275, %v152
    %v156 = vshrl.u32 2475754826, %v153
    %v157 = vor.u32 %v155, %v156
    %v158 = vshll.u32 2475754826, %v152
    %v159 = vshrl.u32 2131351028, %v153
    %v160 = vor.u32 %v158, %v159
    %v161 = vshll.u32 2131351028, %v152
    %v162 = vshrl.u32 2102212464, %v153
    %v163 = vor.u32 %v161, %v162
    %v164 = vshll.u32 2102212464, %v152
    %v165 = vshrl.u32 920167782, %v153
    %v166 = vor.u32 %v164, %v165
    %v167 = vshll.u32 920167782, %v152
    %v168 = vshrl.u32 1326507024, %v153
    %v169 = vor.u32 %v167, %v168
    %vm170 = vcmp.lt.s32.totalorder %v151, 1
    %vm171 = vcmp.lt.s32.totalorder %v151, 2
    %vm172 = vcmp.lt.s32.totalorder %v151, 3
    %vm173 = vcmp.lt.s32.totalorder %v151, 4
    %v174 = vsel %vm170, %v154, %v157
    %v175 = vsel %vm173, %v163, 2102212464
    %v176 = vsel %vm172, %v160, %v175
    %v177 = vsel %vm171, %v174, %v176
    %v178 = vsel %vm170, %v157, %v160
    %v179 = vsel %vm173, %v166, 920167782
    %v180 = vsel %vm172, %v163, %v179
    %v181 = vsel %vm171, %v178, %v180
    %v182 = vsel %vm170, %v160, %v163
    %v183 = vsel %vm173, %v169, 1326507024
    %v184 = vsel %vm172, %v166, %v183
    %v185 = vsel %vm171, %v182, %v184
    %v186 = vshll.u32 %v146, 8
    %v187 = vand.u32 %v186, 65535
    %v188 = vshrl.u32 %v186, 16
    %v189 = vand.u32 %v185, 65535
    %v190 = vshrl.u32 %v185, 16
    %v191 = vmul.u32 %v187, %v189
    %v192 = vmul.u32 %v187, %v190
    %v193 = vmul.u32 %v188, %v189
    %v194 = vmul.u32 %v188, %v190
    %v195 = vshll.u32 %v192, 16
    %v196 = vshrl.u32 %v192, 16
    %v197 = vshll.u32 %v193, 16
    %v198 = vshrl.u32 %v193, 16
    %vm199 = vc.u32 %v191, %v195
    %v200 = vsel %vm199, 1, 0
    %v201 = vadd.s32 %v191, %v195
    %v202 = vadd.s32 %v194, %v200
    %vm203 = vc.u32 %v201, %v197
    %v204 = vsel %vm203, 1, 0
    %v205 = vadd.s32 %v201, %v197
    %v206 = vadd.s32 %v202, %v204
    %v207 = vadd.s32 %v206, %v196
    %v208 = vadd.s32 %v207, %v198
    %v209 = vand.u32 %v186, 65535
    %v210 = vshrl.u32 %v186, 16
    %v211 = vand.u32 %v181, 65535
    %v212 = vshrl.u32 %v181, 16
    %v213 = vmul.u32 %v209, %v211
    %v214 = vmul.u32 %v209, %v212
    %v215 = vmul.u32 %v210, %v211
    %v216 = vmul.u32 %v210, %v212
    %v217 = vshll.u32 %v214, 16
    %v218 = vshrl.u32 %v214, 16
    %v219 = vshll.u32 %v215, 16
    %v220 = vshrl.u32 %v215, 16
    %vm221 = vc.u32 %v213, %v217
    %v222 = vsel %vm221, 1, 0
    %v223 = vadd.s32 %v213, %v217
    %v224 = vadd.s32 %v216, %v222
    %vm225 = vc.u32 %v223, %v219
    %v226 = vsel %vm225, 1, 0
    %v227 = vadd.s32 %v223, %v219
    %v228 = vadd.s32 %v224, %v226
    %v229 = vadd.s32 %v228, %v218
    %v230 = vadd.s32 %v229, %v220
    %v231 = vmul.u32 %v186, %v177
    %v232 = vadd.s32 %v208, %v227
    %vm233 = vc.u32 %v208, %v227
    %v234 = vadd.s32 %v230, 1
    %v235 = vsel %vm233, %v234, %v230
    %v236 = vadd.s32 %v231, %v235
    %v237 = vadd.s32 %v236, 536870912
    %v238 = vshrl.u32 %v237, 30
    %v239 = vshll.u32 %v238, 30
    %v240 = vsub.s32 %v236, %v239
    %vm241 = vcmp.lt.s32.totalorder %v240, 0
    %v242 = vsub.s32 0, %v240
    %v243 = vsel %vm241, %v242, %v240
    %v244 = vclz %v243
    %v245 = vsub.s32 %v244, 2
    %vm246 = vcmp.gt.s32.totalorder 0, %v245
    %v247 = vsel %vm246, 0, %v245
    %v248 = vsub.s32 32, %v247
    %v249 = vshll.u32 %v240, %v247
    %v250 = vshrl.u32 %v232, %v248
    %v251 = vor.u32 %v249, %v250
    %v252 = vsub.s32 4294967266, %v247
    %v253 = vadd.s32 %v252, 127
    %v254 = vshll.u32 %v253, 23
    %v255 = vor.u32 4788187, %v254
    %v256 = vand.u32 2147483647, %v255
    %v258 = vcvt.s32.f32 %v251
    %v259 = vmul.f32 %v258, %v256
    %v260 = vxor.u32 %v259, 2147483648
    %v261 = vsel %vm140, %v260, %v259
    %v262 = vsub.s32 4, %v238
    %v263 = vsel %vm140, %v262, %v238
    %v264 = vsel %vm139, %v127, %v261
    %v265 = vsel %vm139, 0, %v263
    %v266 = vmul.f32 %v264, %v264
    %v267 = vmul.f32 %v266, -0.001358992
    %v268 = vadd.f32 %v267, 0.041655596
    %v269 = vmul.f32 %v266, %v268
    %v270 = vadd.f32 %v269, -0.4999988
    %v271 = vmul.f32 %v266, %v270
    %v272 = vadd.f32 1.0, %v271
    %v273 = vmul.f32 %v264, %v264
    %v274 = vmul.f32 %v273, -0.00019511016
    %v275 = vadd.f32 %v274, 0.008332121
    %v276 = vmul.f32 %v273, %v275
    %v277 = vadd.f32 %v276, -0.16666654
    %v278 = vmul.f32 %v273, %v277
    %v279 = vadd.f32 %v278, 1.0
    %v280 = vmul.f32 %v279, %v264
    %vm281 = vweird.f32 %v127
    %v282 = vand.u32 %v265, 3
    %vm283 = vcmp.lt.s32.totalorder %v282, 2
    %vm284 = vcmp.eq.s32.totalorder %v282, 0
    %v285 = vxor.u32 %v280, 2147483648
    %v286 = vsel %vm284, %v272, %v285
    %vm287 = vcmp.eq.s32.totalorder %v282, 2
    %v288 = vxor.u32 %v272, 2147483648
    %v289 = vsel %vm287, %v288, %v280
    %v290 = vsel %vm283, %v286, %v289
    %v291 = vsel %vm281, nan, %v290
    %v292 = vand.u32 2147483647, %v130
    %vm293 = vcmp.le.f32.partialorder %v292, 0.7853982
    %vm294 = vcmp.lt.s32.totalorder %v130, 0
    %v295 = vand.u32 %v130, 2139095040
    %v296 = vshrl.u32 %v295, 23
    %v297 = vsub.s32 %v296, 127
    %v298 = vand.u32 2147483647, %v130
    %v299 = vand.u32 %v298, 8388607
    %v300 = vor.u32 %v299, 8388608
    %v301 = vsub.s32 0, %v300
    %v302 = vadd.s32 %v297, 1
    %vm303 = vcmp.gt.s32.totalorder %v302, 0
    %v304 = vsel %vm303, %v302, 0
    %v305 = vshrl.u32 %v304, 5
    %v306 = vand.u32 %v304, 31
    %v307 = vsub.s32 32, %v306
    %v308 = vshrl.u32 683565275, %v307
    %v309 = vshll.u32 683565275, %v306
    %v310 = vshrl.u32 2475754826, %v307
    %v311 = vor.u32 %v309, %v310
    %v312 = vshll.u32 2475754826, %v306
    %v313 = vshrl.u32 2131351028, %v307
    %v314 = vor.u32 %v312, %v313
    %v315 = vshll.u32 2131351028, %v306
    %v316 = vshrl.u32 2102212464, %v307
    %v317 = vor.u32 %v315, %v316
    %v318 = vshll.u32 2102212464, %v306
    %v319 = vshrl.u32 920167782, %v307
    %v320 = vor.u32 %v318, %v319
    %v321 = vshll.u32 920167782, %v306
    %v322 = vshrl.u32 1326507024, %v307
    %v323 = vor.u32 %v321, %v322
    %vm324 = vcmp.lt.s32.totalorder %v305, 1
    %vm325 = vcmp.lt.s32.totalorder %v305, 2
    %vm326 = vcmp.lt.s32.totalorder %v305, 3
    %vm327 = vcmp.lt.s32.totalorder %v305, 4
    %v328 = vsel %vm324, %v308, %v311
    %v329 = vsel %vm327, %v317, 2102212464
    %v330 = vsel %vm326, %v314, %v329
    %v331 = vsel %vm325, %v328, %v330
    %v332 = vsel %vm324, %v311, %v314
    %v333 = vsel %vm327, %v320, 920167782
    %v334 = vsel %vm326, %v317, %v333
    %v335 = vsel %vm325, %v332, %v334
    %v336 = vsel %vm324, %v314, %v317
    %v337 = vsel %vm327, %v323, 1326507024
    %v338 = vsel %vm326, %v320, %v337
    %v339 = vsel %vm325, %v336, %v338
    %v340 = vshll.u32 %v300, 8
    %v341 = vand.u32 %v340, 65535
    %v342 = vshrl.u32 %v340, 16
    %v343 = vand.u32 %v339, 65535
    %v344 = vshrl.u32 %v339, 16
    %v345 = vmul.u32 %v341, %v343
    %v346 = vmul.u32 %v341, %v344
    %v347 = vmul.u32 %v342, %v343
    %v348 = vmul.u32 %v342, %v344
    %v349 = vshll.u32 %v346, 16
    %v350 = vshrl.u32 %v346, 16
    %v351 = vshll.u32 %v347, 16
    %v352 = vshrl.u32 %v347, 16
    %vm353 = vc.u32 %v345, %v349
    %v354 = vsel %vm353, 1, 0
    %v355 = vadd.s32 %v345, %v349
    %v356 = vadd.s32 %v348, %v354
    %vm357 = vc.u32 %v355, %v351
    %v358 = vsel %vm357, 1, 0
    %v359 = vadd.s32 %v355, %v351
    %v360 = vadd.s32 %v356, %v358
    %v361 = vadd.s32 %v360, %v350
    %v362 = vadd.s32 %v361, %v352
    %v363 = vand.u32 %v340, 65535
    %v364 = vshrl.u32 %v340, 16
    %v365 = vand.u32 %v335, 65535
    %v366 = vshrl.u32 %v335, 16
    %v367 = vmul.u32 %v363, %v365
    %v368 = vmul.u32 %v363, %v366
    %v369 = vmul.u32 %v364, %v365
    %v370 = vmul.u32 %v364, %v366
    %v371 = vshll.u32 %v368, 16
    %v372 = vshrl.u32 %v368, 16
    %v373 = vshll.u32 %v369, 16
    %v374 = vshrl.u32 %v369, 16
    %vm375 = vc.u32 %v367, %v371
    %v376 = vsel %vm375, 1, 0
    %v377 = vadd.s32 %v367, %v371
    %v378 = vadd.s32 %v370, %v376
    %vm379 = vc.u32 %v377, %v373
    %v380 = vsel %vm379, 1, 0
    %v381 = vadd.s32 %v377, %v373
    %v382 = vadd.s32 %v378, %v380
    %v383 = vadd.s32 %v382, %v372
    %v384 = vadd.s32 %v383, %v374
    %v385 = vmul.u32 %v340, %v331
    %v386 = vadd.s32 %v362, %v381
    %vm387 = vc.u32 %v362, %v381
    %v388 = vadd.s32 %v384, 1
    %v389 = vsel %vm387, %v388, %v384
    %v390 = vadd.s32 %v385, %v389
    %v391 = vadd.s32 %v390, 536870912
    %v392 = vshrl.u32 %v391, 30
    %v393 = vshll.u32 %v392, 30
    %v394 = vsub.s32 %v390, %v393
    %vm395 = vcmp.lt.s32.totalorder %v394, 0
    %v396 = vsub.s32 0, %v394
    %v397 = vsel %vm395, %v396, %v394
    %v398 = vclz %v397
    %v399 = vsub.s32 %v398, 2
    %vm400 = vcmp.gt.s32.totalorder 0, %v399
    %v401 = vsel %vm400, 0, %v399
    %v402 = vsub.s32 32, %v401
    %v403 = vshll.u32 %v394, %v401
    %v404 = vshrl.u32 %v386, %v402
    %v405 = vor.u32 %v403, %v404
    %v406 = vsub.s32 4294967266, %v401
    %v407 = vadd.s32 %v406, 127
    %v408 = vshll.u32 %v407, 23
    %v409 = vor.u32 4788187, %v408
    %v410 = vand.u32 2147483647, %v409
    %v412 = vcvt.s32.f32 %v405
    %v413 = vmul.f32 %v412, %v410
    %v414 = vxor.u32 %v413, 2147483648
    %v415 = vsel %vm294, %v414, %v413
    %v416 = vsub.s32 4, %v392
    %v417 = vsel %vm294, %v416, %v392
    %v418 = vsel %vm293, %v130, %v415
    %v419 = vsel %vm293, 0, %v417
    %v420 = vmul.f32 %v418, %v418
    %v421 = vmul.f32 %v420, -0.001358992
    %v422 = vadd.f32 %v421, 0.041655596
    %v423 = vmul.f32 %v420, %v422
    %v424 = vadd.f32 %v423, -0.4999988
    %v425 = vmul.f32 %v420, %v424
    %v426 = vadd.f32 1.0, %v425
    %v427 = vmul.f32 %v418, %v418
    %v428 = vmul.f32 %v427, -0.00019511016
    %v429 = vadd.f32 %v428, 0.008332121
    %v430 = vmul.f32 %v427, %v429
    %v431 = vadd.f32 %v430, -0.16666654
    %v432 = vmul.f32 %v427, %v431
    %v433 = vadd.f32 %v432, 1.0
    %v434 = vmul.f32 %v433, %v418
    %vm435 = vweird.f32 %v130
    %v436 = vand.u32 %v419, 3
    %vm437 = vcmp.lt.s32.totalorder %v436, 2
    %vm438 = vcmp.eq.s32.totalorder %v436, 0
    %v439 = vxor.u32 %v434, 2147483648
    %v440 = vsel %vm438, %v426, %v439
    %vm441 = vcmp.eq.s32.totalorder %v436, 2
    %v442 = vxor.u32 %v426, 2147483648
    %v443 = vsel %vm441, %v442, %v434
    %v444 = vsel %vm437, %v440, %v443
    %v445 = vsel %vm435, nan, %v444
    %v446 = vand.u32 2147483647, %v133
    %vm447 = vcmp.le.f32.partialorder %v446, 0.7853982
    %vm448 = vcmp.lt.s32.totalorder %v133, 0
    %v449 = vand.u32 %v133, 2139095040
    %v450 = vshrl.u32 %v449, 23
    %v451 = vsub.s32 %v450, 127
    %v452 = vand.u32 2147483647, %v133
    %v453 = vand.u32 %v452, 8388607
    %v454 = vor.u32 %v453, 8388608
    %v455 = vsub.s32 0, %v454
    %v456 = vadd.s32 %v451, 1
    %vm457 = vcmp.gt.s32.totalorder %v456, 0
    %v458 = vsel %vm457, %v456, 0
    %v459 = vshrl.u32 %v458, 5
    %v460 = vand.u32 %v458, 31
    %v461 = vsub.s32 32, %v460
    %v462 = vshrl.u32 683565275, %v461
    %v463 = vshll.u32 683565275, %v460
    %v464 = vshrl.u32 2475754826, %v461
    %v465 = vor.u32 %v463, %v464
    %v466 = vshll.u32 2475754826, %v460
    %v467 = vshrl.u32 2131351028, %v461
    %v468 = vor.u32 %v466, %v467
    %v469 = vshll.u32 2131351028, %v460
    %v470 = vshrl.u32 2102212464, %v461
    %v471 = vor.u32 %v469, %v470
    %v472 = vshll.u32 2102212464, %v460
    %v473 = vshrl.u32 920167782, %v461
    %v474 = vor.u32 %v472, %v473
    %v475 = vshll.u32 920167782, %v460
    %v476 = vshrl.u32 1326507024, %v461
    %v477 = vor.u32 %v475, %v476
    %vm478 = vcmp.lt.s32.totalorder %v459, 1
    %vm479 = vcmp.lt.s32.totalorder %v459, 2
    %vm480 = vcmp.lt.s32.totalorder %v459, 3
    %vm481 = vcmp.lt.s32.totalorder %v459, 4
    %v482 = vsel %vm478, %v462, %v465
    %v483 = vsel %vm481, %v471, 2102212464
    %v484 = vsel %vm480, %v468, %v483
    %v485 = vsel %vm479, %v482, %v484
    %v486 = vsel %vm478, %v465, %v468
    %v487 = vsel %vm481, %v474, 920167782
    %v488 = vsel %vm480, %v471, %v487
    %v489 = vsel %vm479, %v486, %v488
    %v490 = vsel %vm478, %v468, %v471
    %v491 = vsel %vm481, %v477, 1326507024
    %v492 = vsel %vm480, %v474, %v491
    %v493 = vsel %vm479, %v490, %v492
    %v494 = vshll.u32 %v454, 8
    %v495 = vand.u32 %v494, 65535
    %v496 = vshrl.u32 %v494, 16
    %v497 = vand.u32 %v493, 65535
    %v498 = vshrl.u32 %v493, 16
    %v499 = vmul.u32 %v495, %v497
    %v500 = vmul.u32 %v495, %v498
    %v501 = vmul.u32 %v496, %v497
    %v502 = vmul.u32 %v496, %v498
    %v503 = vshll.u32 %v500, 16
    %v504 = vshrl.u32 %v500, 16
    %v505 = vshll.u32 %v501, 16
    %v506 = vshrl.u32 %v501, 16
    %vm507 = vc.u32 %v499, %v503
    %v508 = vsel %vm507, 1, 0
    %v509 = vadd.s32 %v499, %v503
    %v510 = vadd.s32 %v502, %v508
    %vm511 = vc.u32 %v509, %v505
    %v512 = vsel %vm511, 1, 0
    %v513 = vadd.s32 %v509, %v505
    %v514 = vadd.s32 %v510, %v512
    %v515 = vadd.s32 %v514, %v504
    %v516 = vadd.s32 %v515, %v506
    %v517 = vand.u32 %v494, 65535
    %v518 = vshrl.u32 %v494, 16
    %v519 = vand.u32 %v489, 65535
    %v520 = vshrl.u32 %v489, 16
    %v521 = vmul.u32 %v517, %v519
    %v522 = vmul.u32 %v517, %v520
    %v523 = vmul.u32 %v518, %v519
    %v524 = vmul.u32 %v518, %v520
    %v525 = vshll.u32 %v522, 16
    %v526 = vshrl.u32 %v522, 16
    %v527 = vshll.u32 %v523, 16
    %v528 = vshrl.u32 %v523, 16
    %vm529 = vc.u32 %v521, %v525
    %v530 = vsel %vm529, 1, 0
    %v531 = vadd.s32 %v521, %v525
    %v532 = vadd.s32 %v524, %v530
    %vm533 = vc.u32 %v531, %v527
    %v534 = vsel %vm533, 1, 0
    %v535 = vadd.s32 %v531, %v527
    %v536 = vadd.s32 %v532, %v534
    %v537 = vadd.s32 %v536, %v526
    %v538 = vadd.s32 %v537, %v528
    %v539 = vmul.u32 %v494, %v485
    %v540 = vadd.s32 %v516, %v535
    %vm541 = vc.u32 %v516, %v535
    %v542 = vadd.s32 %v538, 1
    %v543 = vsel %vm541, %v542, %v538
    %v544 = vadd.s32 %v539, %v543
    %v545 = vadd.s32 %v544, 536870912
    %v546 = vshrl.u32 %v545, 30
    %v547 = vshll.u32 %v546, 30
    %v548 = vsub.s32 %v544, %v547
    %vm549 = vcmp.lt.s32.totalorder %v548, 0
    %v550 = vsub.s32 0, %v548
    %v551 = vsel %vm549, %v550, %v548
    %v552 = vclz %v551
    %v553 = vsub.s32 %v552, 2
    %vm554 = vcmp.gt.s32.totalorder 0, %v553
    %v555 = vsel %vm554, 0, %v553
    %v556 = vsub.s32 32, %v555
    %v557 = vshll.u32 %v548, %v555
    %v558 = vshrl.u32 %v540, %v556
    %v559 = vor.u32 %v557, %v558
    %v560 = vsub.s32 4294967266, %v555
    %v561 = vadd.s32 %v560, 127
    %v562 = vshll.u32 %v561, 23
    %v563 = vor.u32 4788187, %v562
    %v564 = vand.u32 2147483647, %v563
    %v566 = vcvt.s32.f32 %v559
    %v567 = vmul.f32 %v566, %v564
    %v568 = vxor.u32 %v567, 2147483648
    %v569 = vsel %vm448, %v568, %v567
    %v570 = vsub.s32 4, %v546
    %v571 = vsel %vm448, %v570, %v546
    %v572 = vsel %vm447, %v133, %v569
    %v573 = vsel %vm447, 0, %v571
    %v574 = vmul.f32 %v572, %v572
    %v575 = vmul.f32 %v574, -0.001358992
    %v576 = vadd.f32 %v575, 0.041655596
    %v577 = vmul.f32 %v574, %v576
    %v578 = vadd.f32 %v577, -0.4999988
    %v579 = vmul.f32 %v574, %v578
    %v580 = vadd.f32 1.0, %v579
    %v581 = vmul.f32 %v572, %v572
    %v582 = vmul.f32 %v581, -0.00019511016
    %v583 = vadd.f32 %v582, 0.008332121
    %v584 = vmul.f32 %v581, %v583
    %v585 = vadd.f32 %v584, -0.16666654
    %v586 = vmul.f32 %v581, %v585
    %v587 = vadd.f32 %v586, 1.0
    %v588 = vmul.f32 %v587, %v572
    %vm589 = vweird.f32 %v133
    %v590 = vand.u32 %v573, 3
    %vm591 = vcmp.lt.s32.totalorder %v590, 2
    %vm592 = vcmp.eq.s32.totalorder %v590, 0
    %v593 = vxor.u32 %v588, 2147483648
    %v594 = vsel %vm592, %v580, %v593
    %vm595 = vcmp.eq.s32.totalorder %v590, 2
    %v596 = vxor.u32 %v580, 2147483648
    %v597 = vsel %vm595, %v596, %v588
    %v598 = vsel %vm591, %v594, %v597
    %v599 = vsel %vm589, nan, %v598
    %v600 = vand.u32 2147483647, %v136
    %vm601 = vcmp.le.f32.partialorder %v600, 0.7853982
    %vm602 = vcmp.lt.s32.totalorder %v136, 0
    %v603 = vand.u32 %v136, 2139095040
    %v604 = vshrl.u32 %v603, 23
    %v605 = vsub.s32 %v604, 127
    %v606 = vand.u32 2147483647, %v136
    %v607 = vand.u32 %v606, 8388607
    %v608 = vor.u32 %v607, 8388608
    %v609 = vsub.s32 0, %v608
    %v610 = vadd.s32 %v605, 1
    %vm611 = vcmp.gt.s32.totalorder %v610, 0
    %v612 = vsel %vm611, %v610, 0
    %v613 = vshrl.u32 %v612, 5
    %v614 = vand.u32 %v612, 31
    %v615 = vsub.s32 32, %v614
    %v616 = vshrl.u32 683565275, %v615
    %v617 = vshll.u32 683565275, %v614
    %v618 = vshrl.u32 2475754826, %v615
    %v619 = vor.u32 %v617, %v618
    %v620 = vshll.u32 2475754826, %v614
    %v621 = vshrl.u32 2131351028, %v615
    %v622 = vor.u32 %v620, %v621
    %v623 = vshll.u32 2131351028, %v614
    %v624 = vshrl.u32 2102212464, %v615
    %v625 = vor.u32 %v623, %v624
    %v626 = vshll.u32 2102212464, %v614
    %v627 = vshrl.u32 920167782, %v615
    %v628 = vor.u32 %v626, %v627
    %v629 = vshll.u32 920167782, %v614
    %v630 = vshrl.u32 1326507024, %v615
    %v631 = vor.u32 %v629, %v630
    %vm632 = vcmp.lt.s32.totalorder %v613, 1
    %vm633 = vcmp.lt.s32.totalorder %v613, 2
    %vm634 = vcmp.lt.s32.totalorder %v613, 3
    %vm635 = vcmp.lt.s32.totalorder %v613, 4
    %v636 = vsel %vm632, %v616, %v619
    %v637 = vsel %vm635, %v625, 2102212464
    %v638 = vsel %vm634, %v622, %v637
    %v639 = vsel %vm633, %v636, %v638
    %v640 = vsel %vm632, %v619, %v622
    %v641 = vsel %vm635, %v628, 920167782
    %v642 = vsel %vm634, %v625, %v641
    %v643 = vsel %vm633, %v640, %v642
    %v644 = vsel %vm632, %v622, %v625
    %v645 = vsel %vm635, %v631, 1326507024
    %v646 = vsel %vm634, %v628, %v645
    %v647 = vsel %vm633, %v644, %v646
    %v648 = vshll.u32 %v608, 8
    %v649 = vand.u32 %v648, 65535
    %v650 = vshrl.u32 %v648, 16
    %v651 = vand.u32 %v647, 65535
    %v652 = vshrl.u32 %v647, 16
    %v653 = vmul.u32 %v649, %v651
    %v654 = vmul.u32 %v649, %v652
    %v655 = vmul.u32 %v650, %v651
    %v656 = vmul.u32 %v650, %v652
    %v657 = vshll.u32 %v654, 16
    %v658 = vshrl.u32 %v654, 16
    %v659 = vshll.u32 %v655, 16
    %v660 = vshrl.u32 %v655, 16
    %vm661 = vc.u32 %v653, %v657
    %v662 = vsel %vm661, 1, 0
    %v663 = vadd.s32 %v653, %v657
    %v664 = vadd.s32 %v656, %v662
    %vm665 = vc.u32 %v663, %v659
    %v666 = vsel %vm665, 1, 0
    %v667 = vadd.s32 %v663, %v659
    %v668 = vadd.s32 %v664, %v666
    %v669 = vadd.s32 %v668, %v658
    %v670 = vadd.s32 %v669, %v660
    %v671 = vand.u32 %v648, 65535
    %v672 = vshrl.u32 %v648, 16
    %v673 = vand.u32 %v643, 65535
    %v674 = vshrl.u32 %v643, 16
    %v675 = vmul.u32 %v671, %v673
    %v676 = vmul.u32 %v671, %v674
    %v677 = vmul.u32 %v672, %v673
    %v678 = vmul.u32 %v672, %v674
    %v679 = vshll.u32 %v676, 16
    %v680 = vshrl.u32 %v676, 16
    %v681 = vshll.u32 %v677, 16
    %v682 = vshrl.u32 %v677, 16
    %vm683 = vc.u32 %v675, %v679
    %v684 = vsel %vm683, 1, 0
    %v685 = vadd.s32 %v675, %v679
    %v686 = vadd.s32 %v678, %v684
    %vm687 = vc.u32 %v685, %v681
    %v688 = vsel %vm687, 1, 0
    %v689 = vadd.s32 %v685, %v681
    %v690 = vadd.s32 %v686, %v688
    %v691 = vadd.s32 %v690, %v680
    %v692 = vadd.s32 %v691, %v682
    %v693 = vmul.u32 %v648, %v639
    %v694 = vadd.s32 %v670, %v689
    %vm695 = vc.u32 %v670, %v689
    %v696 = vadd.s32 %v692, 1
    %v697 = vsel %vm695, %v696, %v692
    %v698 = vadd.s32 %v693, %v697
    %v699 = vadd.s32 %v698, 536870912
    %v700 = vshrl.u32 %v699, 30
    %v701 = vshll.u32 %v700, 30
    %v702 = vsub.s32 %v698, %v701
    %vm703 = vcmp.lt.s32.totalorder %v702, 0
    %v704 = vsub.s32 0, %v702
    %v705 = vsel %vm703, %v704, %v702
    %v706 = vclz %v705
    %v707 = vsub.s32 %v706, 2
    %vm708 = vcmp.gt.s32.totalorder 0, %v707
    %v709 = vsel %vm708, 0, %v707
    %v710 = vsub.s32 32, %v709
    %v711 = vshll.u32 %v702, %v709
    %v712 = vshrl.u32 %v694, %v710
    %v713 = vor.u32 %v711, %v712
    %v714 = vsub.s32 4294967266, %v709
    %v715 = vadd.s32 %v714, 127
    %v716 = vshll.u32 %v715, 23
    %v717 = vor.u32 4788187, %v716
    %v718 = vand.u32 2147483647, %v717
    %v720 = vcvt.s32.f32 %v713
    %v721 = vmul.f32 %v720, %v718
    %v722 = vxor.u32 %v721, 2147483648
    %v723 = vsel %vm602, %v722, %v721
    %v724 = vsub.s32 4, %v700
    %v725 = vsel %vm602, %v724, %v700
    %v726 = vsel %vm601, %v136, %v723
    %v727 = vsel %vm601, 0, %v725
    %v728 = vmul.f32 %v726, %v726
    %v729 = vmul.f32 %v728, -0.001358992
    %v730 = vadd.f32 %v729, 0.041655596
    %v731 = vmul.f32 %v728, %v730
    %v732 = vadd.f32 %v731, -0.4999988
    %v733 = vmul.f32 %v728, %v732
    %v734 = vadd.f32 1.0, %v733
    %v735 = vmul.f32 %v726, %v726
    %v736 = vmul.f32 %v735, -0.00019511016
    %v737 = vadd.f32 %v736, 0.008332121
    %v738 = vmul.f32 %v735, %v737
    %v739 = vadd.f32 %v738, -0.16666654
    %v740 = vmul.f32 %v735, %v739
    %v741 = vadd.f32 %v740, 1.0
    %v742 = vmul.f32 %v741, %v726
    %vm743 = vweird.f32 %v136
    %v744 = vand.u32 %v727, 3
    %vm745 = vcmp.lt.s32.totalorder %v744, 2
    %vm746 = vcmp.eq.s32.totalorder %v744, 0
    %v747 = vxor.u32 %v742, 2147483648
    %v748 = vsel %vm746, %v734, %v747
    %vm749 = vcmp.eq.s32.totalorder %v744, 2
    %v750 = vxor.u32 %v734, 2147483648
    %v751 = vsel %vm749, %v750, %v742
    %v752 = vsel %vm745, %v748, %v751
    %v753 = vsel %vm743, nan, %v752
    %v754 = vld [vmem:[%s2] sm:$0xff]
    %v755 = vld [vmem:[%s2 + $0x8] sm:$0xff]
    %v756 = vld [vmem:[%s2 + $0x10] sm:$0xff]
    %v757 = vld [vmem:[%s2 + $0x18] sm:$0xff]
    %v759 = vsel %vm96, %v754, 0
    %v762 = vsel %vm96, %v755, 0
    %v765 = vsel %vm96, %v756, 0
    %v768 = vsel %vm96, %v757, 0
    %770 = vmatpush.msra.mxu0 0.0
    %771 = vmatpush.msra.mxu0 0.0
    %772 = vmatpush.msra.mxu0 0.0
    %773 = vmatpush.msra.mxu0 0.0
    %774 = vmatpush.msra.mxu0 0.0
    %775 = vmatpush.msra.mxu0 0.0
    %776 = vmatpush.msra.mxu0 0.0
    %777 = vmatpush.msra.mxu0 0.0
    %778 = vmatpush.msra.mxu0 0.0
    %779 = vmatpush.msra.mxu0 0.0
    %780 = vmatpush.msra.mxu0 0.0
    %781 = vmatpush.msra.mxu0 0.0
    %782 = vmatpush.msra.mxu0 %v753
    %783 = vmatpush.msra.mxu0 %v599
    %784 = vmatpush.msra.mxu0 %v445
    %785 = vmatpush.msra.mxu0 %v291
    %786 = vmatmul.f32.gmra.mxu0 %v759
    %v787 = vpop.f32.mrf.mxu0
    %v788 = vadd.f32 0.0, %v787
    %789 = vmatmul.f32.gmra.mxu0 %v762
    %v790 = vpop.f32.mrf.mxu0
    %v791 = vadd.f32 0.0, %v790
    %792 = vmatmul.f32.gmra.mxu0 %v765
    %v793 = vpop.f32.mrf.mxu0
    %v794 = vadd.f32 0.0, %v793
    %795 = vmatmul.f32.gmra.mxu0 %v768
    %v796 = vpop.f32.mrf.mxu0
    %v797 = vadd.f32 0.0, %v796
    %798 = vdwg.mxu0
    %v799 = vtanh.pop %v788
    %v800 = vtanh.pop %v791
    %v801 = vtanh.pop %v794
    %v802 = vtanh.pop %v797
    %v803 = vld [vmem:[%s3] sm:$0xff]
    %v804 = vld [vmem:[%s3 + $0x8] sm:$0xff]
    %v805 = vld [vmem:[%s3 + $0x10] sm:$0xff]
    %v806 = vld [vmem:[%s3 + $0x18] sm:$0xff]
    %808 = vset.pattern.permute.xlu0 0
    %809 = vperm.xlu0 %808, %v803
    %v810 = vpop.permute.xlu0 %809
    %813 = vset.pattern.permute.xlu0 0
    %814 = vperm.xlu0 %813, %v804
    %v815 = vpop.permute.xlu0 %814
    %818 = vset.pattern.permute.xlu0 0
    %819 = vperm.xlu0 %818, %v805
    %v820 = vpop.permute.xlu0 %819
    %823 = vset.pattern.permute.xlu0 0
    %824 = vperm.xlu0 %823, %v806
    %v825 = vpop.permute.xlu0 %824
    %v827 = vmul.f32 %v799, %v810
    %v828 = vmul.f32 %v800, %v815
    %v829 = vmul.f32 %v801, %v820
    %v830 = vmul.f32 %v802, %v825
    %v831 = vadd.f32 %v827, %v828
    %v832 = vadd.f32 %v831, %v829
    %v833 = vadd.f32 %v832, %v830
    %v834 = vrot.slane %v833, 4
    %v835 = vadd.f32 %v833, %v834
    %v836 = vrot.slane %v835, 2
    %v837 = vadd.f32 %v835, %v836
    %v838 = vrot.slane %v837, 1
    %v839 = vadd.f32 %v837, %v838
    %840 = vst [vmem:[%s6] sm:$0x1] %v839
    // Predicated region
    $region22: #{hybrid_model_forward.2} parent=1 // pred_check
      _
    $region23: #{hybrid_model_forward.2} parent=1 // pred_check_branch
      %842 = sbr.rel (0) target = $region25
    $region24: #{hybrid_model_forward.2} parent=1 // pred_region
      _
    $region25: #{hybrid_model_forward.2} parent=1 // pred_fallthru
      _
    // Predicated region
    $region26: #{hybrid_model_forward.2} parent=1 // pred_check
      _
    $region27: #{hybrid_model_forward.2} parent=1 // pred_check_branch
      %844 = sbr.rel (0) target = $region29
    $region28: #{hybrid_model_forward.2} parent=1 // pred_region
      _
    $region29: #{hybrid_model_forward.2} parent=1 // pred_fallthru
      _

</llo_original>
